<compile_context>
chip_gen: v7x
topology: tpu7x:2x2x1
jax: 0.10.0
libtpu: 0.0.40
codegen_flags: <defaults>
</compile_context>

<pallas_src>
import functools

import jax
import jax.numpy as jnp
from jax import lax
from jax.experimental import pallas as pl
from jax.experimental.pallas import tpu as pltpu


# ----------------------------------------------------------------------------
# Tiling helpers
# ----------------------------------------------------------------------------
def _round_up(n, m):
    return ((n + m - 1) // m) * m


def _pick_tile(n, preferred, quantum):
    """Largest tile <= preferred that divides n and is a multiple of quantum.

    Falls back to the full dimension (always a legal block shape)."""
    if n <= preferred:
        return n
    t = (preferred // quantum) * quantum
    while t >= quantum:
        if n % t == 0:
            return t
        t -= quantum
    return n


def _seq_chunk(seq_len, b_pad, din, hid):
    """Sequence-chunk length: big enough to amortize grid overhead / feed the
    MXU, small enough that the per-chunk f32 slabs stay a few MiB."""
    bytes_per_row = 4 * (din + 3 * hid + 4 * hid)   # x + gates + a/b/c/out slabs
    target_rows = (6 * 1024 * 1024) // max(1, bytes_per_row)
    target_rows = max(b_pad, min(2048, target_rows))
    ts = max(1, target_rows // b_pad)
    return min(seq_len, ts)


@functools.lru_cache(maxsize=1)
def _vmem_limit():
    """Generation-aware VMEM limit: ~3/4 of physical, capped at 100 MiB.

    v5e/v6e (128 MiB) -> 96 MiB, v7x (64 MiB) -> 48 MiB.  Conservative 48 MiB
    fallback if the query is unavailable."""
    cap = 64 * 1024 * 1024
    try:
        cap = int(pltpu.get_tpu_info().vmem_capacity_bytes)
    except Exception:
        pass
    return max(32 * 1024 * 1024, min((cap * 3) // 4, 100 * 1024 * 1024))


# ----------------------------------------------------------------------------
# Pallas kernels
# ----------------------------------------------------------------------------
def minlstm_layer_kernel(x_ref, w_ref, b_ref, c0_ref, hseq_ref, cT_ref,
                         *, ts, tb, hid, residual, valid_last):
    """One MinLSTM layer, one sequence chunk per grid step (time-major rows).

    x_ref:    (TS*Bp, Din)  chunk of flattened (s-major, b-minor) inputs (f32)
    w_ref:    (Din, 3H)     [f | i | h_tilde] gate weights (bf16, resident)
    b_ref:    (1, 3H)       gate bias (f32)
    c0_ref:   (Bp, H)       initial cell state
    hseq_ref: (TS*Bp, H)    per-timestep hidden output (residual fused)
    cT_ref:   (Bp, H)       cell-state carry / final cell state (resident)
    """
    rows = ts * tb

    @pl.when(pl.program_id(0) == 0)
    def _init():
        cT_ref[...] = c0_ref[...].astype(cT_ref.dtype)

    # One lane-dense bf16 MXU matmul for every timestep of the chunk.
    gates = (jnp.dot(x_ref[...].astype(jnp.bfloat16), w_ref[...],
                     preferred_element_type=jnp.float32)
             + b_ref[...].astype(jnp.float32))                  # (rows, 3H) f32

    # Slab (off-critical-path) gate nonlinearities -> per-step affine maps:
    #   c_t = a_t * c_{t-1} + bv_t
    f = jax.nn.sigmoid(gates[:, :hid])
    i = jax.nn.sigmoid(gates[:, hid:2 * hid])
    h_tilde = gates[:, 2 * hid:]
    inv = 1.0 / (f + i)                      # exact division, off the chain
    a = f * inv
    bv = (i * inv) * h_tilde

    # Mask padded timesteps (only present in the last chunk) to identity maps.
    if valid_last != ts:
        row_idx = lax.broadcasted_iota(jnp.int32, (rows, hid), 0)
        limit = jnp.where(pl.program_id(0) == pl.num_programs(0) - 1,
                          valid_last * tb, rows)
        keep = row_idx < limit
        a = jnp.where(keep, a, 1.0)
        bv = jnp.where(keep, bv, 0.0)

    # Hillis-Steele inclusive scan over time: after the scan (a_t, bv_t) is the
    # composed affine map of steps [0..t].  log2(ts) full-width slab passes.
    d = 1
    while d < ts:
        sh = d * tb
        a_prev = jnp.concatenate(
            [jnp.ones((sh, hid), jnp.float32), a[:rows - sh]], axis=0)
        b_prev = jnp.concatenate(
            [jnp.zeros((sh, hid), jnp.float32), bv[:rows - sh]], axis=0)
        bv = a * b_prev + bv        # uses pre-update `a` (combine order matters)
        a = a * a_prev
        d *= 2

    # Apply the cross-chunk carry (broadcast over time) + fused residual.
    c_carry = cT_ref[...].astype(jnp.float32)                   # (Bp, H)
    c_all = a * jnp.tile(c_carry, (ts, 1)) + bv                 # (rows, H)
    out = c_all + x_ref[...].astype(jnp.float32) if residual else c_all
    hseq_ref[...] = out.astype(hseq_ref.dtype)

    # New carry = cell state at the chunk's last timestep.
    cT_ref[...] = c_all[(ts - 1) * tb:, :].astype(cT_ref.dtype)


def head_kernel(x_ref, ln_w_ref, fc_w_ref, fc_b_ref, out_ref, xn_ref):
    """LayerNorm(bias=False) + vocab projection, tiled over (rows, vocab).

    The normalized row tile is computed once per row tile (v == 0), cached in
    VMEM as bf16, and reused for every vocab tile.
    """
    @pl.when(pl.program_id(1) == 0)
    def _layernorm():
        x = x_ref[...].astype(jnp.float32)
        mu = jnp.mean(x, axis=-1, keepdims=True)
        var = jnp.mean(jnp.square(x - mu), axis=-1, keepdims=True)
        xn = (x - mu) * lax.rsqrt(var + 1e-5)        # torch.nn.LayerNorm eps
        xn = xn * ln_w_ref[...].astype(jnp.float32)
        xn_ref[...] = xn.astype(xn_ref.dtype)

    out_ref[...] = (jnp.dot(xn_ref[...], fc_w_ref[...],
                            preferred_element_type=jnp.float32)
                    + fc_b_ref[...].astype(jnp.float32)).astype(out_ref.dtype)


# ----------------------------------------------------------------------------
# Wrappers (pallas_call with grids / BlockSpecs)
# ----------------------------------------------------------------------------
def minlstm_layer(x_2d, w_bf16, b, c0, *, ts, b_pad, valid_last, residual):
    """x_2d: (S_pad*Bp, Din) time-major flattened; c0: (Bp, H)."""
    nrows, din = x_2d.shape
    hid = c0.shape[-1]
    n_chunks = nrows // (ts * b_pad)

    kernel = functools.partial(minlstm_layer_kernel, ts=ts, tb=b_pad, hid=hid,
                               residual=residual, valid_last=valid_last)
    hseq, cT = pl.pallas_call(
        kernel,
        grid_spec=pltpu.PrefetchScalarGridSpec(
            num_scalar_prefetch=0,
            grid=(n_chunks,),
            in_specs=[
                pl.BlockSpec((ts * b_pad, din), lambda s: (s, 0)),
                pl.BlockSpec((din, 3 * hid), lambda s: (0, 0)),
                pl.BlockSpec((1, 3 * hid), lambda s: (0, 0)),
                pl.BlockSpec((b_pad, hid), lambda s: (0, 0)),
            ],
            out_specs=(
                pl.BlockSpec((ts * b_pad, hid), lambda s: (s, 0)),
                pl.BlockSpec((b_pad, hid), lambda s: (0, 0)),   # resident carry
            ),
        ),
        out_shape=(jax.ShapeDtypeStruct((nrows, hid), jnp.float32),
                   jax.ShapeDtypeStruct((b_pad, hid), jnp.float32)),
        compiler_params=pltpu.CompilerParams(
            dimension_semantics=("arbitrary",),       # sequential state carry
            vmem_limit_bytes=_vmem_limit()),
    )(x_2d, w_bf16, b, c0)
    return hseq, cT


def ln_fc_head(x_nh, ln_w, fc_w_bf16, fc_b):
    n_rows, hid = x_nh.shape
    vocab = fc_w_bf16.shape[1]
    tn = _pick_tile(n_rows, 512, 8)
    tv = _pick_tile(vocab, 512, 128)
    grid = (n_rows // tn, vocab // tv)

    return pl.pallas_call(
        head_kernel,
        grid_spec=pltpu.PrefetchScalarGridSpec(
            num_scalar_prefetch=0,
            grid=grid,
            in_specs=[
                pl.BlockSpec((tn, hid), lambda n, v: (n, 0)),
                pl.BlockSpec((1, hid), lambda n, v: (0, 0)),
                pl.BlockSpec((hid, tv), lambda n, v: (0, v)),
                pl.BlockSpec((1, tv), lambda n, v: (0, v)),
            ],
            out_specs=pl.BlockSpec((tn, tv), lambda n, v: (n, v)),
            scratch_shapes=[pltpu.VMEM((tn, hid), jnp.bfloat16)],
        ),
        out_shape=jax.ShapeDtypeStruct((n_rows, vocab), jnp.float32),
        compiler_params=pltpu.CompilerParams(
            dimension_semantics=("parallel", "arbitrary"),
            vmem_limit_bytes=_vmem_limit()),
    )(x_nh, ln_w, fc_w_bf16, fc_b)


# ----------------------------------------------------------------------------
# Parameters & model forward
# ----------------------------------------------------------------------------
def init_params(key, cfg):
    V, E = cfg["vocab_size"], cfg["emb_size"]
    hidden_sizes = cfg["hidden_sizes"]
    keys = jax.random.split(key, 3 + 2 * len(hidden_sizes))
    params = {}
    params["emb"] = 0.02 * jax.random.normal(keys[0], (V, E), jnp.float32)
    layers = []
    din = E
    for li, H in enumerate(hidden_sizes):
        kw, kb = keys[1 + 2 * li], keys[2 + 2 * li]
        w = jax.random.normal(kw, (din, 3 * H), jnp.float32) / jnp.sqrt(din)
        b = 0.01 * jax.random.normal(kb, (1, 3 * H), jnp.float32)
        layers.append((w, b))
        din = H
    params["rnn"] = layers
    params["ln_w"] = jnp.ones((1, hidden_sizes[-1]), jnp.float32)
    params["fc_w"] = jax.random.normal(keys[-2], (hidden_sizes[-1], V),
                                       jnp.float32) / jnp.sqrt(hidden_sizes[-1])
    params["fc_b"] = 0.01 * jax.random.normal(keys[-1], (1, V), jnp.float32)
    return params


def nlp_model_forward(params, ids, h=None, c=None):
    """ids: (B, S) int32 -> (logits (B, S, V), h list, c list)."""
    B, S = ids.shape
    Bp = max(8, _round_up(B, 8))   # pad batch to full sublanes
    hidden_sizes = [w.shape[1] // 3 for (w, _) in params["rnn"]]
    E = params["emb"].shape[1]

    # Embedding gather directly in time-major order (no post-gather transpose).
    x = params["emb"][ids.T]                       # (S, B, E)
    if Bp != B:
        x = jnp.pad(x, ((0, 0), (0, Bp - B), (0, 0)))

    # One chunk size for the whole stack; pad S to a multiple of it (padded
    # timesteps are masked to identity maps inside the kernel).
    ts = _seq_chunk(S, Bp, max([E] + hidden_sizes), max(hidden_sizes))
    n_chunks = -(-S // ts)
    S_pad = n_chunks * ts
    if S_pad != S:
        x = jnp.pad(x, ((0, S_pad - S), (0, 0), (0, 0)))
    valid_last = S - (n_chunks - 1) * ts
    x = x.reshape(S_pad * Bp, E)                   # row = s*Bp + b

    # TODO(synk): mingru.MinLSTM's `h` argument is unused — the minLSTM
    # recurrence carries c only and hidden == cell; `norm=True` and dropout>0
    # (training mode) are not implemented (demo uses norm=False, dropout=0.0).
    h_out, c_out = [], []
    for li, (w, b) in enumerate(params["rnn"]):
        din = w.shape[0]
        H = w.shape[1] // 3
        if c is not None:
            c0 = jnp.pad(c[li].astype(jnp.float32), ((0, Bp - B), (0, 0)))
        else:
            c0 = jnp.zeros((Bp, H), jnp.float32)
        residual = (din == H)                      # residual when dims match
        hseq, cT = minlstm_layer(x, w.astype(jnp.bfloat16), b, c0,
                                 ts=ts, b_pad=Bp, valid_last=valid_last,
                                 residual=residual)
        h_out.append(cT[:B])                       # minLSTM: hidden == cell
        c_out.append(cT[:B])
        x = hseq                                   # residual already fused

    H_last = hidden_sizes[-1]
    # Drop seq/batch padding, reorder tokens to batch-major for (B, S, V).
    x_bt = (x.reshape(S_pad, Bp, H_last)[:S, :B]
            .transpose(1, 0, 2).reshape(B * S, H_last))
    n_rows = B * S
    n_pad = _round_up(n_rows, 8)
    if n_pad != n_rows:
        x_bt = jnp.pad(x_bt, ((0, n_pad - n_rows), (0, 0)))
    logits = ln_fc_head(x_bt, params["ln_w"],
                        params["fc_w"].astype(jnp.bfloat16), params["fc_b"])
    logits = logits[:n_rows].reshape(B, S, -1)
    return logits, h_out, c_out


# ----------------------------------------------------------------------------
# Pure-JAX reference (for correctness check only)
# ----------------------------------------------------------------------------
def nlp_model_reference(params, ids, c=None):
    B, S = ids.shape
    x = params["emb"][ids]                         # (B, S, E)
    c_out = []
    for li, (w, b) in enumerate(params["rnn"]):
        H = w.shape[1] // 3
        c0 = c[li] if c is not None else jnp.zeros((B, H), jnp.float32)
        gates = jnp.einsum("bsd,dh->bsh", x, w) + b
        f = jax.nn.sigmoid(gates[..., :H])
        i = jax.nn.sigmoid(gates[..., H:2 * H])
        ht = gates[..., 2 * H:]

        def step(cprev, t):
            denom = f[:, t] + i[:, t]
            cnew = (f[:, t] / denom) * cprev + (i[:, t] / denom) * ht[:, t]
            return cnew, cnew

        cT, hseq = lax.scan(step, c0, jnp.arange(S))
        hseq = jnp.transpose(hseq, (1, 0, 2))
        c_out.append(cT)
        x = hseq + x if x.shape[-1] == H else hseq
    mu = jnp.mean(x, -1, keepdims=True)
    var = jnp.mean(jnp.square(x - mu), -1, keepdims=True)
    xn = (x - mu) * lax.rsqrt(var + 1e-5) * params["ln_w"][0]
    logits = xn @ params["fc_w"] + params["fc_b"][0]
    return logits, c_out


# ----------------------------------------------------------------------------
# Demo
# ----------------------------------------------------------------------------
if __name__ == "__main__":
    cfg = dict(vocab_size=64, emb_size=32, hidden_sizes=[32, 32],
               dropout=0.0, norm=False)
    key = jax.random.PRNGKey(0)
    pkey, dkey = jax.random.split(key)
    params = init_params(pkey, cfg)

    ids = jax.random.randint(dkey, (2, 8), 0, cfg["vocab_size"], dtype=jnp.int32)
    logits, h, c = nlp_model_forward(params, ids)
    jax.block_until_ready(logits)

    assert logits.shape == (2, 8, cfg["vocab_size"])
    assert len(h) == len(cfg["hidden_sizes"]) and len(c) == len(cfg["hidden_sizes"])
    assert bool(jnp.all(jnp.isfinite(logits)))

    ref_logits, ref_c = nlp_model_reference(params, ids)
    assert jnp.allclose(logits, ref_logits, rtol=1e-2, atol=1e-2)
    assert jnp.allclose(c[-1], ref_c[-1], rtol=1e-2, atol=1e-2)
    print("KERNEL_OK")
</pallas_src>

<mosaic_0001>
module attributes {stable_mosaic.version = 11 : i64} {
  func.func @minlstm_layer_kernel(%arg0: i32, %arg1: memref<64x32xf32, #tpu.memory_space<vmem>>, %arg2: memref<32x96xbf16, #tpu.memory_space<vmem>>, %arg3: memref<1x96xf32, #tpu.memory_space<vmem>>, %arg4: memref<8x32xf32, #tpu.memory_space<vmem>>, %arg5: memref<64x32xf32, #tpu.memory_space<vmem>>, %arg6: memref<8x32xf32, #tpu.memory_space<vmem>>) attributes {dimension_semantics = [#tpu.dimension_semantics<arbitrary>], iteration_bounds = array<i64: 1>, scalar_prefetch = 0 : i64, scratch_operands = 0 : i64, tpu.core_type = #tpu.core_type<tc>, window_params = [{transform_indices = @transform_0, window_bounds = array<i64: 64, 32>}, {pipeline_mode = #tpu.pipeline_mode<synchronous>, transform_indices = @transform_1, window_bounds = array<i64: 32, 96>}, {pipeline_mode = #tpu.pipeline_mode<synchronous>, transform_indices = @transform_2, window_bounds = array<i64: 1, 96>}, {pipeline_mode = #tpu.pipeline_mode<synchronous>, transform_indices = @transform_3, window_bounds = array<i64: 8, 32>}, {transform_indices = @transform_4, window_bounds = array<i64: 64, 32>}, {pipeline_mode = #tpu.pipeline_mode<synchronous>, transform_indices = @transform_5, window_bounds = array<i64: 8, 32>}]} {
    %c0_i32 = arith.constant 0 : i32
    %0 = arith.cmpi eq, %arg0, %c0_i32 : i32
    %1 = arith.extui %0 : i1 to i32
    %c0_i32_0 = arith.constant 0 : i32
    %2 = arith.cmpi ne, %1, %c0_i32_0 : i32
    scf.if %2 {
      %c0_23 = arith.constant 0 : index
      %c0_24 = arith.constant 0 : index
      %65 = vector.load %arg4[%c0_23, %c0_24] : memref<8x32xf32, #tpu.memory_space<vmem>>, vector<8x32xf32>
      %c0_25 = arith.constant 0 : index
      %c0_26 = arith.constant 0 : index
      %66 = vector.load %arg6[%c0_25, %c0_26] : memref<8x32xf32, #tpu.memory_space<vmem>>, vector<8x32xf32>
      tpu.vector_store %arg6[%c0_25, %c0_26], %65 {strides = array<i32>} : memref<8x32xf32, #tpu.memory_space<vmem>>, vector<8x32xf32>,
    } else {
    }
    %c0 = arith.constant 0 : index
    %c0_1 = arith.constant 0 : index
    %3 = vector.load %arg1[%c0, %c0_1] : memref<64x32xf32, #tpu.memory_space<vmem>>, vector<64x32xf32>
    %4 = arith.truncf %3 : vector<64x32xf32> to vector<64x32xbf16>
    %c0_2 = arith.constant 0 : index
    %c0_3 = arith.constant 0 : index
    %5 = vector.load %arg2[%c0_2, %c0_3] : memref<32x96xbf16, #tpu.memory_space<vmem>>, vector<32x96xbf16>
    %cst = arith.constant dense<0.000000e+00> : vector<64x96xf32>
    %6 = tpu.matmul %4, %5, %cst {dimension_numbers = #tpu.dot_dimension_numbers<[1], [0], [0], [1], [0, 0, 1, 1], [], []>} : vector<64x32xbf16>, vector<32x96xbf16>, vector<64x96xf32> -> vector<64x96xf32>
    %c0_4 = arith.constant 0 : index
    %c0_5 = arith.constant 0 : index
    %7 = vector.load %arg3[%c0_4, %c0_5] : memref<1x96xf32, #tpu.memory_space<vmem>>, vector<1x96xf32>
    %8 = vector.broadcast %7 : vector<1x96xf32> to vector<64x96xf32>
    %9 = arith.addf %6, %8 : vector<64x96xf32>
    %10 = vector.extract_strided_slice %9 {offsets = [0, 0], sizes = [64, 32], strides = [1, 1]} : vector<64x96xf32> to vector<64x32xf32>
    %11 = arith.negf %10 : vector<64x32xf32>
    %12 = math.exp %11 : vector<64x32xf32>
    %cst_6 = arith.constant 1.000000e+00 : f32
    %13 = vector.broadcast %cst_6 : f32 to vector<64x32xf32>
    %14 = arith.addf %13, %12 : vector<64x32xf32>
    %15 = arith.divf %13, %14 : vector<64x32xf32>
    %16 = vector.extract_strided_slice %9 {offsets = [0, 32], sizes = [64, 32], strides = [1, 1]} : vector<64x96xf32> to vector<64x32xf32>
    %17 = arith.negf %16 : vector<64x32xf32>
    %18 = math.exp %17 : vector<64x32xf32>
    %cst_7 = arith.constant 1.000000e+00 : f32
    %19 = vector.broadcast %cst_7 : f32 to vector<64x32xf32>
    %20 = arith.addf %19, %18 : vector<64x32xf32>
    %21 = arith.divf %19, %20 : vector<64x32xf32>
    %22 = vector.extract_strided_slice %9 {offsets = [0, 64], sizes = [64, 32], strides = [1, 1]} : vector<64x96xf32> to vector<64x32xf32>
    %23 = arith.addf %15, %21 : vector<64x32xf32>
    %cst_8 = arith.constant 1.000000e+00 : f32
    %24 = vector.broadcast %cst_8 : f32 to vector<64x32xf32>
    %25 = arith.divf %24, %23 : vector<64x32xf32>
    %26 = arith.mulf %15, %25 : vector<64x32xf32>
    %27 = arith.mulf %21, %25 : vector<64x32xf32>
    %28 = arith.mulf %27, %22 : vector<64x32xf32>
    %cst_9 = arith.constant 1.000000e+00 : f32
    %29 = vector.broadcast %cst_9 : f32 to vector<8x32xf32>
    %30 = vector.extract_strided_slice %26 {offsets = [0, 0], sizes = [56, 32], strides = [1, 1]} : vector<64x32xf32> to vector<56x32xf32>
    %31 = tpu.concatenate %29, %30 in 0 : vector<8x32xf32>, vector<56x32xf32> -> vector<64x32xf32>
    %cst_10 = arith.constant 0.000000e+00 : f32
    %32 = vector.broadcast %cst_10 : f32 to vector<8x32xf32>
    %33 = vector.extract_strided_slice %28 {offsets = [0, 0], sizes = [56, 32], strides = [1, 1]} : vector<64x32xf32> to vector<56x32xf32>
    %34 = tpu.concatenate %32, %33 in 0 : vector<8x32xf32>, vector<56x32xf32> -> vector<64x32xf32>
    %35 = arith.mulf %26, %34 : vector<64x32xf32>
    %36 = arith.addf %35, %28 : vector<64x32xf32>
    %37 = arith.mulf %26, %31 : vector<64x32xf32>
    %cst_11 = arith.constant 1.000000e+00 : f32
    %38 = vector.broadcast %cst_11 : f32 to vector<16x32xf32>
    %39 = vector.extract_strided_slice %37 {offsets = [0, 0], sizes = [48, 32], strides = [1, 1]} : vector<64x32xf32> to vector<48x32xf32>
    %40 = tpu.concatenate %38, %39 in 0 : vector<16x32xf32>, vector<48x32xf32> -> vector<64x32xf32>
    %cst_12 = arith.constant 0.000000e+00 : f32
    %41 = vector.broadcast %cst_12 : f32 to vector<16x32xf32>
    %42 = vector.extract_strided_slice %36 {offsets = [0, 0], sizes = [48, 32], strides = [1, 1]} : vector<64x32xf32> to vector<48x32xf32>
    %43 = tpu.concatenate %41, %42 in 0 : vector<16x32xf32>, vector<48x32xf32> -> vector<64x32xf32>
    %44 = arith.mulf %37, %43 : vector<64x32xf32>
    %45 = arith.addf %44, %36 : vector<64x32xf32>
    %46 = arith.mulf %37, %40 : vector<64x32xf32>
    %cst_13 = arith.constant 1.000000e+00 : f32
    %47 = vector.broadcast %cst_13 : f32 to vector<32x32xf32>
    %48 = vector.extract_strided_slice %46 {offsets = [0, 0], sizes = [32, 32], strides = [1, 1]} : vector<64x32xf32> to vector<32x32xf32>
    %49 = tpu.concatenate %47, %48 in 0 : vector<32x32xf32>, vector<32x32xf32> -> vector<64x32xf32>
    %cst_14 = arith.constant 0.000000e+00 : f32
    %50 = vector.broadcast %cst_14 : f32 to vector<32x32xf32>
    %51 = vector.extract_strided_slice %45 {offsets = [0, 0], sizes = [32, 32], strides = [1, 1]} : vector<64x32xf32> to vector<32x32xf32>
    %52 = tpu.concatenate %50, %51 in 0 : vector<32x32xf32>, vector<32x32xf32> -> vector<64x32xf32>
    %53 = arith.mulf %46, %52 : vector<64x32xf32>
    %54 = arith.addf %53, %45 : vector<64x32xf32>
    %55 = arith.mulf %46, %49 : vector<64x32xf32>
    %c0_15 = arith.constant 0 : index
    %c0_16 = arith.constant 0 : index
    %56 = vector.load %arg6[%c0_15, %c0_16] : memref<8x32xf32, #tpu.memory_space<vmem>>, vector<8x32xf32>
    %57 = tpu.concatenate %56, %56, %56, %56, %56, %56, %56, %56 in 0 : vector<8x32xf32>, vector<8x32xf32>, vector<8x32xf32>, vector<8x32xf32>, vector<8x32xf32>, vector<8x32xf32>, vector<8x32xf32>, vector<8x32xf32> -> vector<64x32xf32>
    %58 = arith.mulf %55, %57 : vector<64x32xf32>
    %59 = arith.addf %58, %54 : vector<64x32xf32>
    %c0_17 = arith.constant 0 : index
    %c0_18 = arith.constant 0 : index
    %60 = vector.load %arg1[%c0_17, %c0_18] : memref<64x32xf32, #tpu.memory_space<vmem>>, vector<64x32xf32>
    %61 = arith.addf %59, %60 : vector<64x32xf32>
    %c0_19 = arith.constant 0 : index
    %c0_20 = arith.constant 0 : index
    %62 = vector.load %arg5[%c0_19, %c0_20] : memref<64x32xf32, #tpu.memory_space<vmem>>, vector<64x32xf32>
    tpu.vector_store %arg5[%c0_19, %c0_20], %61 {strides = array<i32>} : memref<64x32xf32, #tpu.memory_space<vmem>>, vector<64x32xf32>,
    %63 = vector.extract_strided_slice %59 {offsets = [56, 0], sizes = [8, 32], strides = [1, 1]} : vector<64x32xf32> to vector<8x32xf32>
    %c0_21 = arith.constant 0 : index
    %c0_22 = arith.constant 0 : index
    %64 = vector.load %arg6[%c0_21, %c0_22] : memref<8x32xf32, #tpu.memory_space<vmem>>, vector<8x32xf32>
    tpu.vector_store %arg6[%c0_21, %c0_22], %63 {strides = array<i32>} : memref<8x32xf32, #tpu.memory_space<vmem>>, vector<8x32xf32>,
    return
  }
  func.func @transform_0(%arg0: i32) -> (i32, i32) {
    %c0_i32 = arith.constant 0 : i32
    %c0_i32_0 = arith.constant 0 : i32
    return %arg0, %c0_i32 : i32, i32
  }
  func.func @transform_1(%arg0: i32) -> (i32, i32) {
    %c0_i32 = arith.constant 0 : i32
    %c0_i32_0 = arith.constant 0 : i32
    %c0_i32_1 = arith.constant 0 : i32
    return %c0_i32, %c0_i32_0 : i32, i32
  }
  func.func @transform_2(%arg0: i32) -> (i32, i32) {
    %c0_i32 = arith.constant 0 : i32
    %c0_i32_0 = arith.constant 0 : i32
    %c0_i32_1 = arith.constant 0 : i32
    return %c0_i32, %c0_i32_0 : i32, i32
  }
  func.func @transform_3(%arg0: i32) -> (i32, i32) {
    %c0_i32 = arith.constant 0 : i32
    %c0_i32_0 = arith.constant 0 : i32
    %c0_i32_1 = arith.constant 0 : i32
    return %c0_i32, %c0_i32_0 : i32, i32
  }
  func.func @transform_4(%arg0: i32) -> (i32, i32) {
    %c0_i32 = arith.constant 0 : i32
    %c0_i32_0 = arith.constant 0 : i32
    return %arg0, %c0_i32 : i32, i32
  }
  func.func @transform_5(%arg0: i32) -> (i32, i32) {
    %c0_i32 = arith.constant 0 : i32
    %c0_i32_0 = arith.constant 0 : i32
    %c0_i32_1 = arith.constant 0 : i32
    return %c0_i32, %c0_i32_0 : i32, i32
  }
}

</mosaic_0001>

<llo_original>
// kernel: tpu_custom_call.1
$region0: #{tpu_custom_call.1}
  #allocation0 [shape = 'u32[]', space=smem, size = 0x4, offset = 0x4, fixed_abs, tag = 'smem constant byte address 0x4 - core index']
  #allocation1 [shape = 'u32[144,128]{1,0:T(1,128)}', space=vmem, size = 0x12000, scoped, tag = 'internal scratch']
  %s0 = inlined_call_operand.vmem [shape: f32[64,32], index: 0, kind: input, shape index: {}]
  %s1 = inlined_call_operand.vmem [shape: bf16[32,96], index: 1, kind: input, shape index: {}]
  %s2 = inlined_call_operand.vmem [shape: f32[1,96], index: 2, kind: input, shape index: {}]
  %s3 = inlined_call_operand.vmem [shape: f32[8,32], index: 3, kind: input, shape index: {}]
  %s4 = inlined_call_operand.vmem [shape: f32[64,32], index: 4, kind: output, shape index: {0}]
  %s5 = inlined_call_operand.hbm [shape: f32[8,32], index: 5, kind: output, shape index: {1}]
  %6 = xla_tuple %s4, %s5
  %s7 = sld [smem:[#allocation0]]
  $region38: #{tpu_custom_call.1} parent=0
    _
  %s9 = ssub.s32 1, %s7
  %s10 = scalar_select 0, %s9, %s7
  $region1: #{tpu_custom_call.1} parent=0
    #allocation2 [shape = 'u8[4096]{0}', space=vmem, size = 0x1000, scoped, tag = 'output window, operand 1, single buffered']
    #allocation3 [shape = 's32[1]{0}', space=sflag, size = 0x4, scoped, tag = 'scoped memory for tpu_custom_call.1']
    %11 = vsyncpa [#allocation3], 0
    // Predicated region
    $region2: #{tpu_custom_call.1} parent=1 // pred_check
      _
    $region3: #{tpu_custom_call.1} parent=1 // pred_check_branch
      %13 = sbr.rel (0) target = $region5
    $region4: #{tpu_custom_call.1} parent=1 // pred_region
      _
    $region5: #{tpu_custom_call.1} parent=1 // pred_fallthru
      _
    // Predicated region
    $region6: #{tpu_custom_call.1} parent=1 // pred_check
      _
    $region7: #{tpu_custom_call.1} parent=1 // pred_check_branch
      %15 = sbr.rel (0) target = $region9
    $region8: #{tpu_custom_call.1} parent=1 // pred_region
      _
    $region9: #{tpu_custom_call.1} parent=1 // pred_fallthru
      _
    // Predicated region
    $region10: #{tpu_custom_call.1} parent=1 // pred_check
      _
    $region11: #{tpu_custom_call.1} parent=1 // pred_check_branch
      %17 = sbr.rel (0) target = $region13
    $region12: #{tpu_custom_call.1} parent=1 // pred_region
      _
    $region13: #{tpu_custom_call.1} parent=1 // pred_fallthru
      _
    // Predicated region
    $region14: #{tpu_custom_call.1} parent=1 // pred_check
      _
    $region15: #{tpu_custom_call.1} parent=1 // pred_check_branch
      %19 = sbr.rel (0) target = $region17
    $region16: #{tpu_custom_call.1} parent=1 // pred_region
      _
    $region17: #{tpu_custom_call.1} parent=1 // pred_fallthru
      _
    %p21 = scmp.eq.s32.totalorder 0, 0
    // Predicated region
    $region18: #{tpu_custom_call.1} parent=1 // pred_check
      %p22 = pneg %p21
    $region19: #{tpu_custom_call.1} parent=1 // pred_check_branch
      %24 = sbr.rel (%p22) target = $region21
    $region20: #{tpu_custom_call.1} parent=1 // pred_region
      %v25 = vld [vmem:[%s3] sm:$0xff]
      %vm26 = vcmask 261120
      %27 = vst.msk [vmem:[#allocation2] sm:$0xff] %vm26, %v25
    $region21: #{tpu_custom_call.1} parent=1 // pred_fallthru
      _
    %v28 = vld [vmem:[%s0] sm:$0xff]
    %v29 = vld [vmem:[%s0 + $0x8] sm:$0xff]
    %v30 = vld [vmem:[%s0 + $0x10] sm:$0xff]
    %v31 = vld [vmem:[%s0 + $0x18] sm:$0xff]
    %v32 = vld [vmem:[%s0 + $0x20] sm:$0xff]
    %v33 = vld [vmem:[%s0 + $0x28] sm:$0xff]
    %v34 = vld [vmem:[%s0 + $0x30] sm:$0xff]
    %v35 = vld [vmem:[%s0 + $0x38] sm:$0xff]
    %v36 = vpack.c.bf16 %v29, %v28
    %v37 = vpack.c.bf16 %v31, %v30
    %v38 = vpack.c.bf16 %v33, %v32
    %v39 = vpack.c.bf16 %v35, %v34
    %v40 = vld [vmem:[%s1] sm:$0xf]
    %v41 = vld [vmem:[%s1 + $0x4] sm:$0xf]
    %v42 = vld [vmem:[%s1 + $0x8] sm:$0xf]
    %v43 = vld [vmem:[%s1 + $0xc] sm:$0xf]
    %v44 = vld [vmem:[%s2] sm:$0x1]
    %v46 = vlaneseq
    %v47 = vshrl.u32 %v46, 7
    %v48 = vsub.s32 0, %v47
    %v49 = vrot.slane %v44, %v48
    %v55 = vunpack.c.l.b16 %v40
    %v56 = vunpack.c.l.b16 %v41
    %v57 = vunpack.c.l.b16 %v42
    %v58 = vunpack.c.l.b16 %v43
    %v59 = vpack.c.b16 %v56, %v55
    %v60 = vpack.c.b16 %v58, %v57
    %vm63 = vcmask 261120
    %v65 = vsel %vm63, %v36, 0
    %v68 = vsel %vm63, %v37, 0
    %v71 = vsel %vm63, %v38, 0
    %v74 = vsel %vm63, %v39, 0
    %76 = vmatprep.subr.bf16.mxu0 0
    %77 = vmatpush1.bf16.msra.mxu0 %v59
    %78 = vmatprep.subr.bf16.mxu0 0
    %79 = vmatpush1.bf16.msra.mxu0 %v60
    %80 = vmatprep.subr.bf16.mxu0 0
    %81 = vmatpush1.bf16.msra.mxu0 0
    %82 = vmatprep.subr.bf16.mxu0 0
    %83 = vmatpush1.bf16.msra.mxu0 0
    %84 = vmatprep.subr.bf16.mxu0 0
    %85 = vmatpush1.bf16.msra.mxu0 0
    %86 = vmatprep.subr.bf16.mxu0 0
    %87 = vmatpush1.bf16.msra.mxu0 0
    %88 = vmatprep.subr.bf16.mxu0 0
    %89 = vmatpush1.bf16.msra.mxu0 0
    %90 = vmatprep.subr.bf16.mxu0 0
    %91 = vmatpush1.bf16.msra.mxu0 0
    %92 = vmatprep.subr.bf16.mxu0 0
    %93 = vmatpush1.bf16.msra.mxu0 0
    %94 = vmatprep.subr.bf16.mxu0 0
    %95 = vmatpush1.bf16.msra.mxu0 0
    %96 = vmatprep.subr.bf16.mxu0 0
    %97 = vmatpush1.bf16.msra.mxu0 0
    %98 = vmatprep.subr.bf16.mxu0 0
    %99 = vmatpush1.bf16.msra.mxu0 0
    %100 = vmatprep.subr.bf16.mxu0 0
    %101 = vmatpush1.bf16.msra.mxu0 0
    %102 = vmatprep.subr.bf16.mxu0 0
    %103 = vmatpush1.bf16.msra.mxu0 0
    %104 = vmatprep.subr.bf16.mxu0 0
    %105 = vmatpush1.bf16.msra.mxu0 0
    %106 = vmatprep.subr.bf16.mxu0 0
    %107 = vmatpush1.bf16.msra.mxu0 0
    %108 = vmatprep.mubr.bf16.mxu0 0
    %109 = vmatmul.mubr.bf16.gmra.mrb[0].mxu0 %v65
    %v110 = vpop.f32.mrb[0].mxu0
    %v111 = vadd.f32 %v49, %v110
    %v112 = vpop.f32.mrb[0].mxu0
    %v113 = vpop.f32.mrb[0].mxu0
    %v114 = vadd.f32 %v49, %v113
    %v115 = vpop.f32.mrb[0].mxu0
    %116 = vmatprep.mubr.bf16.mxu0 0
    %117 = vmatmul.mubr.bf16.gmra.mrb[0].mxu0 %v68
    %v118 = vpop.f32.mrb[0].mxu0
    %v119 = vadd.f32 %v49, %v118
    %v120 = vpop.f32.mrb[0].mxu0
    %v121 = vpop.f32.mrb[0].mxu0
    %v122 = vadd.f32 %v49, %v121
    %v123 = vpop.f32.mrb[0].mxu0
    %124 = vmatprep.mubr.bf16.mxu0 0
    %125 = vmatmul.mubr.bf16.gmra.mrb[0].mxu0 %v71
    %v126 = vpop.f32.mrb[0].mxu0
    %v127 = vadd.f32 %v49, %v126
    %v128 = vpop.f32.mrb[0].mxu0
    %v129 = vpop.f32.mrb[0].mxu0
    %v130 = vadd.f32 %v49, %v129
    %v131 = vpop.f32.mrb[0].mxu0
    %132 = vmatprep.mubr.bf16.mxu0 0
    %133 = vmatmul.mubr.bf16.gmra.mrb[0].mxu0 %v74
    %v134 = vpop.f32.mrb[0].mxu0
    %v135 = vadd.f32 %v49, %v134
    %v136 = vpop.f32.mrb[0].mxu0
    %v137 = vpop.f32.mrb[0].mxu0
    %v138 = vadd.f32 %v49, %v137
    %v139 = vpop.f32.mrb[0].mxu0
    %140 = vdwg.mxu0
    %v141 = vxor.u32 %v111, 2147483648
    %v142 = vxor.u32 %v114, 2147483648
    %v143 = vxor.u32 %v119, 2147483648
    %v144 = vxor.u32 %v122, 2147483648
    %v145 = vxor.u32 %v127, 2147483648
    %v146 = vxor.u32 %v130, 2147483648
    %v147 = vxor.u32 %v135, 2147483648
    %v148 = vxor.u32 %v138, 2147483648
    %v149 = vmul.f32 %v141, 1.442695
    %v150 = vpow.pop %v149
    %v151 = vmul.f32 %v142, 1.442695
    %v152 = vpow.pop %v151
    %v153 = vmul.f32 %v143, 1.442695
    %v154 = vpow.pop %v153
    %v155 = vmul.f32 %v144, 1.442695
    %v156 = vpow.pop %v155
    %v157 = vmul.f32 %v145, 1.442695
    %v158 = vpow.pop %v157
    %v159 = vmul.f32 %v146, 1.442695
    %v160 = vpow.pop %v159
    %v161 = vmul.f32 %v147, 1.442695
    %v162 = vpow.pop %v161
    %v163 = vmul.f32 %v148, 1.442695
    %v164 = vpow.pop %v163
    %v165 = vadd.f32 %v150, 1.0
    %v166 = vadd.f32 %v152, 1.0
    %v167 = vadd.f32 %v154, 1.0
    %v168 = vadd.f32 %v156, 1.0
    %v169 = vadd.f32 %v158, 1.0
    %v170 = vadd.f32 %v160, 1.0
    %v171 = vadd.f32 %v162, 1.0
    %v172 = vadd.f32 %v164, 1.0
    %v173 = vrcp.pop %v165
    %v174 = vmul.f32 1.0, %v173
    %v175 = vrcp.pop %v166
    %v176 = vmul.f32 1.0, %v175
    %v177 = vrcp.pop %v167
    %v178 = vmul.f32 1.0, %v177
    %v179 = vrcp.pop %v168
    %v180 = vmul.f32 1.0, %v179
    %v181 = vrcp.pop %v169
    %v182 = vmul.f32 1.0, %v181
    %v183 = vrcp.pop %v170
    %v184 = vmul.f32 1.0, %v183
    %v185 = vrcp.pop %v171
    %v186 = vmul.f32 1.0, %v185
    %v187 = vrcp.pop %v172
    %v188 = vmul.f32 1.0, %v187
    %197 = vrot.lane.b32.xlu0 %v174, 96
    %v198 = vpop.permute.xlu0 %197
    %199 = vrot.lane.b32.xlu0 %v176, 96
    %v200 = vpop.permute.xlu0 %199
    %201 = vrot.lane.b32.xlu0 %v178, 96
    %v202 = vpop.permute.xlu0 %201
    %203 = vrot.lane.b32.xlu0 %v180, 96
    %v204 = vpop.permute.xlu0 %203
    %205 = vrot.lane.b32.xlu0 %v182, 96
    %v206 = vpop.permute.xlu0 %205
    %207 = vrot.lane.b32.xlu0 %v184, 96
    %v208 = vpop.permute.xlu0 %207
    %209 = vrot.lane.b32.xlu0 %v186, 96
    %v210 = vpop.permute.xlu0 %209
    %211 = vrot.lane.b32.xlu0 %v188, 96
    %v212 = vpop.permute.xlu0 %211
    %v221 = vadd.f32 %v174, %v198
    %v222 = vadd.f32 %v176, %v200
    %v223 = vadd.f32 %v178, %v202
    %v224 = vadd.f32 %v180, %v204
    %v225 = vadd.f32 %v182, %v206
    %v226 = vadd.f32 %v184, %v208
    %v227 = vadd.f32 %v186, %v210
    %v228 = vadd.f32 %v188, %v212
    %v229 = vrcp.pop %v221
    %v230 = vmul.f32 1.0, %v229
    %v231 = vrcp.pop %v222
    %v232 = vmul.f32 1.0, %v231
    %v233 = vrcp.pop %v223
    %v234 = vmul.f32 1.0, %v233
    %v235 = vrcp.pop %v224
    %v236 = vmul.f32 1.0, %v235
    %v237 = vrcp.pop %v225
    %v238 = vmul.f32 1.0, %v237
    %v239 = vrcp.pop %v226
    %v240 = vmul.f32 1.0, %v239
    %v241 = vrcp.pop %v227
    %v242 = vmul.f32 1.0, %v241
    %v243 = vrcp.pop %v228
    %v244 = vmul.f32 1.0, %v243
    %v245 = vmul.f32 %v174, %v230
    %v246 = vmul.f32 %v176, %v232
    %v247 = vmul.f32 %v178, %v234
    %v248 = vmul.f32 %v180, %v236
    %v249 = vmul.f32 %v182, %v238
    %v250 = vmul.f32 %v184, %v240
    %v251 = vmul.f32 %v186, %v242
    %v252 = vmul.f32 %v188, %v244
    %261 = vrot.lane.b32.xlu0 %v230, 32
    %v262 = vpop.permute.xlu0 %261
    %263 = vrot.lane.b32.xlu0 %v232, 32
    %v264 = vpop.permute.xlu0 %263
    %265 = vrot.lane.b32.xlu0 %v234, 32
    %v266 = vpop.permute.xlu0 %265
    %267 = vrot.lane.b32.xlu0 %v236, 32
    %v268 = vpop.permute.xlu0 %267
    %269 = vrot.lane.b32.xlu0 %v238, 32
    %v270 = vpop.permute.xlu0 %269
    %271 = vrot.lane.b32.xlu0 %v240, 32
    %v272 = vpop.permute.xlu0 %271
    %273 = vrot.lane.b32.xlu0 %v242, 32
    %v274 = vpop.permute.xlu0 %273
    %275 = vrot.lane.b32.xlu0 %v244, 32
    %v276 = vpop.permute.xlu0 %275
    %v285 = vmul.f32 %v174, %v262
    %v286 = vmul.f32 %v176, %v264
    %v287 = vmul.f32 %v178, %v266
    %v288 = vmul.f32 %v180, %v268
    %v289 = vmul.f32 %v182, %v270
    %v290 = vmul.f32 %v184, %v272
    %v291 = vmul.f32 %v186, %v274
    %v292 = vmul.f32 %v188, %v276
    %301 = vrot.lane.b32.xlu0 %v111, 96
    %v302 = vpop.permute.xlu0 %301
    %303 = vrot.lane.b32.xlu0 %v114, 96
    %v304 = vpop.permute.xlu0 %303
    %305 = vrot.lane.b32.xlu0 %v119, 96
    %v306 = vpop.permute.xlu0 %305
    %307 = vrot.lane.b32.xlu0 %v122, 96
    %v308 = vpop.permute.xlu0 %307
    %309 = vrot.lane.b32.xlu0 %v127, 96
    %v310 = vpop.permute.xlu0 %309
    %311 = vrot.lane.b32.xlu0 %v130, 96
    %v312 = vpop.permute.xlu0 %311
    %313 = vrot.lane.b32.xlu0 %v135, 96
    %v314 = vpop.permute.xlu0 %313
    %315 = vrot.lane.b32.xlu0 %v138, 96
    %v316 = vpop.permute.xlu0 %315
    %v325 = vmul.f32 %v285, %v302
    %v326 = vmul.f32 %v286, %v304
    %v327 = vmul.f32 %v287, %v306
    %v328 = vmul.f32 %v288, %v308
    %v329 = vmul.f32 %v289, %v310
    %v330 = vmul.f32 %v290, %v312
    %v331 = vmul.f32 %v291, %v314
    %v332 = vmul.f32 %v292, %v316
    %340 = vrot.lane.b32.xlu0 %v325, 96
    %v341 = vpop.permute.xlu0 %340
    %342 = vrot.lane.b32.xlu0 %v326, 96
    %v343 = vpop.permute.xlu0 %342
    %344 = vrot.lane.b32.xlu0 %v327, 96
    %v345 = vpop.permute.xlu0 %344
    %346 = vrot.lane.b32.xlu0 %v328, 96
    %v347 = vpop.permute.xlu0 %346
    %348 = vrot.lane.b32.xlu0 %v329, 96
    %v349 = vpop.permute.xlu0 %348
    %350 = vrot.lane.b32.xlu0 %v330, 96
    %v351 = vpop.permute.xlu0 %350
    %352 = vrot.lane.b32.xlu0 %v331, 96
    %v353 = vpop.permute.xlu0 %352
    %v361 = vmul.f32 %v245, 0.0
    %v362 = vmul.f32 %v246, %v341
    %v363 = vmul.f32 %v247, %v343
    %v364 = vmul.f32 %v248, %v345
    %v365 = vmul.f32 %v249, %v347
    %v366 = vmul.f32 %v250, %v349
    %v367 = vmul.f32 %v251, %v351
    %v368 = vmul.f32 %v252, %v353
    %370 = vrot.lane.b32.xlu0 %v332, 96
    %v371 = vpop.permute.xlu0 %370
    %v373 = vadd.f32 %v361, %v341
    %v374 = vadd.f32 %v362, %v343
    %v375 = vadd.f32 %v363, %v345
    %v376 = vadd.f32 %v364, %v347
    %v377 = vadd.f32 %v365, %v349
    %v378 = vadd.f32 %v366, %v351
    %v379 = vadd.f32 %v367, %v353
    %v380 = vadd.f32 %v368, %v371
    %v381 = vmul.f32 %v246, %v245
    %v382 = vmul.f32 %v247, %v246
    %v383 = vmul.f32 %v248, %v247
    %v384 = vmul.f32 %v249, %v248
    %v385 = vmul.f32 %v250, %v249
    %v386 = vmul.f32 %v251, %v250
    %v387 = vmul.f32 %v252, %v251
    %v388 = vmul.f32 %v381, 0.0
    %v389 = vmul.f32 %v382, %v373
    %v390 = vmul.f32 %v383, %v374
    %v391 = vmul.f32 %v384, %v375
    %v392 = vmul.f32 %v385, %v376
    %v393 = vmul.f32 %v386, %v377
    %v394 = vmul.f32 %v387, %v378
    %v395 = vadd.f32 %v361, %v373
    %v396 = vadd.f32 %v388, %v374
    %v397 = vadd.f32 %v389, %v375
    %v398 = vadd.f32 %v390, %v376
    %v399 = vadd.f32 %v391, %v377
    %v400 = vadd.f32 %v392, %v378
    %v401 = vadd.f32 %v393, %v379
    %v402 = vadd.f32 %v394, %v380
    %v403 = vmul.f32 %v382, %v245
    %v404 = vmul.f32 %v383, %v381
    %v405 = vmul.f32 %v384, %v382
    %v406 = vmul.f32 %v385, %v383
    %v407 = vmul.f32 %v386, %v384
    %v408 = vmul.f32 %v387, %v385
    %v409 = vmul.f32 %v403, 0.0
    %v410 = vmul.f32 %v404, 0.0
    %v411 = vmul.f32 %v405, %v395
    %v412 = vmul.f32 %v406, %v396
    %v413 = vmul.f32 %v407, %v397
    %v414 = vmul.f32 %v408, %v398
    %v415 = vadd.f32 %v361, %v395
    %v416 = vadd.f32 %v388, %v396
    %v417 = vadd.f32 %v409, %v397
    %v418 = vadd.f32 %v410, %v398
    %v419 = vadd.f32 %v411, %v399
    %v420 = vadd.f32 %v412, %v400
    %v421 = vadd.f32 %v413, %v401
    %v422 = vadd.f32 %v414, %v402
    %v423 = vmul.f32 %v405, %v245
    %v424 = vmul.f32 %v406, %v381
    %v425 = vmul.f32 %v407, %v403
    %v426 = vmul.f32 %v408, %v404
    %v427 = vld [vmem:[#allocation2] sm:$0xff]
    %v428 = vmul.f32 %v245, %v427
    %v429 = vmul.f32 %v381, %v427
    %v430 = vmul.f32 %v403, %v427
    %v431 = vmul.f32 %v404, %v427
    %v432 = vmul.f32 %v423, %v427
    %v433 = vmul.f32 %v424, %v427
    %v434 = vmul.f32 %v425, %v427
    %v435 = vmul.f32 %v426, %v427
    %v436 = vadd.f32 %v428, %v415
    %v437 = vadd.f32 %v429, %v416
    %v438 = vadd.f32 %v430, %v417
    %v439 = vadd.f32 %v431, %v418
    %v440 = vadd.f32 %v432, %v419
    %v441 = vadd.f32 %v433, %v420
    %v442 = vadd.f32 %v434, %v421
    %v443 = vadd.f32 %v435, %v422
    %v444 = vadd.f32 %v436, %v28
    %v445 = vadd.f32 %v437, %v29
    %v446 = vadd.f32 %v438, %v30
    %v447 = vadd.f32 %v439, %v31
    %v448 = vadd.f32 %v440, %v32
    %v449 = vadd.f32 %v441, %v33
    %v450 = vadd.f32 %v442, %v34
    %v451 = vadd.f32 %v443, %v35
    %452 = vst.msk [vmem:[%s4] sm:$0xff] %vm63, %v444
    %453 = vst.msk [vmem:[%s4 + $0x8] sm:$0xff] %vm63, %v445
    %454 = vst.msk [vmem:[%s4 + $0x10] sm:$0xff] %vm63, %v446
    %455 = vst.msk [vmem:[%s4 + $0x18] sm:$0xff] %vm63, %v447
    %456 = vst.msk [vmem:[%s4 + $0x20] sm:$0xff] %vm63, %v448
    %457 = vst.msk [vmem:[%s4 + $0x28] sm:$0xff] %vm63, %v449
    %458 = vst.msk [vmem:[%s4 + $0x30] sm:$0xff] %vm63, %v450
    %459 = vst.msk [vmem:[%s4 + $0x38] sm:$0xff] %vm63, %v451
    %460 = vst.msk [vmem:[#allocation2] sm:$0xff] %vm63, %v443
    // Predicated region
    $region22: #{tpu_custom_call.1} parent=1 // pred_check
      _
    $region23: #{tpu_custom_call.1} parent=1 // pred_check_branch
      %462 = sbr.rel (0) target = $region25
    $region24: #{tpu_custom_call.1} parent=1 // pred_region
      _
    $region25: #{tpu_custom_call.1} parent=1 // pred_fallthru
      _
    // Predicated region
    $region26: #{tpu_custom_call.1} parent=1 // pred_check
      _
    $region27: #{tpu_custom_call.1} parent=1 // pred_check_branch
      %464 = sbr.rel (0) target = $region29
    $region28: #{tpu_custom_call.1} parent=1 // pred_region
      %s466 = ssub.s32 128, 128
      %467 = vsyncadd [#allocation3], %s466
      %s469 = sshll.u32 [#allocation2], 4
      %s470 = int_to_ptr.vmem [resolvable:$true] %s469
      %472 = dma.vmem_to_hbm [thread:$0]  %s470, 128, %s5, [#allocation3]
    $region29: #{tpu_custom_call.1} parent=1 // pred_fallthru
      _
    // Predicated region
    $region30: #{tpu_custom_call.1} parent=1 // pred_check
      _
    $region31: #{tpu_custom_call.1} parent=1 // pred_check_branch
      %474 = sbr.rel (0) target = $region33
    $region32: #{tpu_custom_call.1} parent=1 // pred_region
      _
    $region33: #{tpu_custom_call.1} parent=1 // pred_fallthru
      _
    // Predicated region
    $region34: #{tpu_custom_call.1} parent=1 // pred_check
      _
    $region35: #{tpu_custom_call.1} parent=1 // pred_check_branch
      %476 = sbr.rel (0) target = $region37
    $region36: #{tpu_custom_call.1} parent=1 // pred_region
      %477 = dma.done [#allocation3], 128
    $region37: #{tpu_custom_call.1} parent=1 // pred_fallthru
      _
    %478 = vsyncpa [#allocation3], 1

</llo_original>
